<compile_context>
chip_gen: v5e
topology: v5e:2x2
jax: 0.10.0
libtpu: 0.0.40
codegen_flags: <defaults>
</compile_context>

<pallas_src>
from functools import partial

import numpy as np
import jax
import jax.numpy as jnp
from jax import lax
from jax.experimental import pallas as pl
from jax.experimental.pallas import tpu as pltpu

INF = 1.0e7
OB_COST = 1.0e4
EPS = 1e-12


def _vmem_limit(nbytes):
    # per-chip cap with headroom (v5e/v6e: 128 MiB physical, v7x: 64 MiB).
    cap = 64 * 1024 * 1024
    try:
        cap = int(getattr(pltpu.get_tpu_info(), "vmem_capacity_bytes", cap))
    except Exception:
        pass
    cap = int(cap * 0.8)                 # leave room for compiler scratch
    return int(min(max(2 * nbytes, 32 * 1024 * 1024), cap))


def _make_shift(h, w, rows, cols):
    """shift(x, dy, dx)[i, j] = x[clip(i+dy, 0, h-1), clip(j+dx, 0, w-1)].

    Full replicate-pad shifts (pltpu.roll + edge fix-up selects).  Used only in
    the cost-map kernel, which runs once per forward.
    """
    row_first = rows == 0
    row_last = rows == h - 1
    col_first = cols == 0
    col_last = cols == w - 1

    def shift(x, dy, dx):
        out = x
        if dy != 0:
            rolled = pltpu.roll(out, shift=(-dy) % h, axis=0)   # rolled[i] = out[i+dy mod h]
            mask = row_last if dy > 0 else row_first
            out = jnp.where(mask, out, rolled)                  # replicate at the edge
        if dx != 0:
            rolled = pltpu.roll(out, shift=(-dx) % w, axis=1)
            mask = col_last if dx > 0 else col_first
            out = jnp.where(mask, out, rolled)
        return out

    return shift


# ----------------------------------------------------------------------------
# Pallas kernel 1: local path cost map (calculate_local_path_costs)
# ----------------------------------------------------------------------------
def _make_cost_map_kernel(w_valid):
    def kernel(obst_ref, coords_ref, bias_ref, cmap_ref):
        h, w = obst_ref.shape
        rows = jax.lax.broadcasted_iota(jnp.int32, (h, w), 0)
        cols = jax.lax.broadcasted_iota(jnp.int32, (h, w), 1)
        shift = _make_shift(h, w, rows, cols)

        obst = obst_ref[...]                       # (H, Wp), edge-padded
        cy = coords_ref[0]                         # y coordinates
        cx = coords_ref[1]                         # x coordinates
        bias = jnp.clip(bias_ref[...], 0.0, OB_COST)

        # gx_to_left / gx_to_right / gy_to_up / gy_to_down convs, replicate pad
        left = cx - shift(cx, 0, -1)               # c[x] - c[x-1]
        right = cx - shift(cx, 0, 1)               # c[x] - c[x+1]
        up = cy - shift(cy, 1, 0)                  # c[y] - c[y+1]
        down = cy - shift(cy, -1, 0)               # c[y] - c[y-1]
        l2, r2, u2, d2 = left * left, right * right, up * up, down * down

        o_ul = shift(obst, -1, -1)                 # obstacles_pd[0:h,   0:w  ]
        o_u = shift(obst, -1, 0)                   # obstacles_pd[0:h,   1:w+1]
        o_ur = shift(obst, -1, 1)                  # obstacles_pd[0:h,   2:w+2]
        o_r = shift(obst, 0, 1)                    # obstacles_pd[1:h+1, 2:w+2]
        o_dl = shift(obst, 1, -1)                  # obstacles_pd[2:h+2, 0:w  ]
        o_d = shift(obst, 1, 0)                    # obstacles_pd[2:h+2, 1:w+1]
        o_dr = shift(obst, 1, 1)                   # obstacles_pd[2:h+2, 2:w+2]

        # lane-padding columns get +INF so the planner never propagates into them
        valid = cols < w_valid

        def put(c, dist2, omax):
            val = jnp.sqrt(dist2 + EPS) + OB_COST * omax + bias
            cmap_ref[c] = jnp.where(valid, val, INF)

        # Channel ordering / obstacle pairings are copied verbatim from the
        # PyTorch reference (note: the reference itself pairs channel 1 with the
        # up-shifted obstacle map, same as channel 3 -- kept for fidelity).
        put(0, l2 + u2, jnp.maximum(o_ul, obst))
        put(1, l2, jnp.maximum(o_u, obst))
        put(2, l2 + d2, jnp.maximum(o_dl, obst))
        put(3, u2, jnp.maximum(o_u, obst))
        cmap_ref[4] = jnp.where(valid, OB_COST * obst + bias, INF)  # 0*r2 + ob*center
        put(5, d2, jnp.maximum(o_d, obst))
        put(6, r2 + u2, jnp.maximum(o_ur, obst))
        put(7, r2, jnp.maximum(o_r, obst))
        put(8, r2 + d2, jnp.maximum(o_dr, obst))

    return kernel


@partial(jax.jit, static_argnames=("w_valid",))
def compute_cost_map(obst, coords, bias, *, w_valid):
    hp, wp = obst.shape
    vmem = pl.BlockSpec(memory_space=pltpu.MemorySpace.VMEM)
    return pl.pallas_call(
        _make_cost_map_kernel(w_valid),
        out_shape=jax.ShapeDtypeStruct((9, hp, wp), jnp.float32),
        in_specs=[vmem, vmem, vmem],
        out_specs=vmem,
        compiler_params=pltpu.CompilerParams(
            vmem_limit_bytes=_vmem_limit(13 * hp * wp * 4)),
    )(obst, coords, bias)


# ----------------------------------------------------------------------------
# Pallas kernel 2: the ENTIRE planner loop (termination loop + extra steps)
# ----------------------------------------------------------------------------
def _make_planner_kernel(additional_steps):
    def kernel(ctrl_ref, colmask_ref, cmap_ref, obst_ref, start_ref,
               g_ref, close_ref, open_ref, status_ref):
        hp, wp = g_ref.shape
        rows = jax.lax.broadcasted_iota(jnp.int32, (hp, wp), 0)
        row_first = rows == 0
        row_last = rows == hp - 1

        obst = obst_ref[...]
        start = start_ref[...]
        colmask = colmask_ref[...]               # (1, Wp) one-hot at the goal column
        gy = ctrl_ref[0]                         # goal row index
        max_steps = ctrl_ref[1]

        # state init (init_g_map / init_closelistmap / init_openlistmap)
        g_ref[...] = jnp.clip(INF * (1.0 - start), 0.0, INF)
        close_ref[...] = jnp.zeros_like(start)
        open_ref[...] = start

        def rshift(x, dy):                       # replicate at the top/bottom rows
            rolled = pltpu.roll(x, shift=(-dy) % hp, axis=0)
            return jnp.where(row_last if dy > 0 else row_first, x, rolled)

        def cshift(x, dx):
            # pure roll, NO column edge fix-up: there is always >= 1 inert pad
            # column (cmap=+INF, obstacle=1, open=0, g=INF), so wrap-around
            # candidates can never win the min and are no-ops in the max-pool;
            # results on the valid columns equal replicate padding exactly.
            return pltpu.roll(x, shift=(-dx) % wp, axis=1)

        def one_update(g, close, opn):
            # g <- min(g, min_c( g[neighbour(c)] + cmap[c] )), c = kx*3 + ky,
            # neighbour offset (dy, dx) = (ky-1, kx-1).  Centre channel (c=4) is
            # skipped: cmap >= 0 so g + cmap[4] >= g can never win the min.
            up, down = rshift(g, -1), rshift(g, 1)
            rowv = (up, g, down)
            cands = []
            for kx in range(3):
                dx = kx - 1
                for ky in range(3):
                    c = kx * 3 + ky
                    if c == 4:
                        continue
                    v = rowv[ky]
                    if dx != 0:
                        v = cshift(v, dx)
                    cands.append(v + cmap_ref[c])
            # balanced min tree: dependency chain ~4 instead of ~8
            m0 = jnp.minimum(cands[0], cands[1])
            m1 = jnp.minimum(cands[2], cands[3])
            m2 = jnp.minimum(cands[4], cands[5])
            m3 = jnp.minimum(cands[6], cands[7])
            g_new = jnp.minimum(
                g, jnp.minimum(jnp.minimum(m0, m1), jnp.minimum(m2, m3)))

            close_new = jnp.maximum(close, opn)

            # separable 3x3 max-pool, stride 1 (open >= 0, so the extra 0 / wrap
            # values are no-ops, identical to the reference -inf padding).
            rmax = jnp.maximum(jnp.maximum(cshift(opn, -1), opn), cshift(opn, 1))
            pooled = jnp.maximum(jnp.maximum(rshift(rmax, -1), rmax),
                                 rshift(rmax, 1))
            open_new = jnp.maximum(pooled - close_new - obst, 0.0)
            return g_new, close_new, open_new

        # ---- main termination loop (reference: while not_done / break on max) ---
        def cond(carry):
            _, not_done, stopped = carry
            return jnp.logical_and(not_done, jnp.logical_not(stopped))

        def body(carry):
            step, _, _ = carry
            g_new, close_new, open_new = one_update(
                g_ref[...], close_ref[...], open_ref[...])
            g_ref[...] = g_new
            close_ref[...] = close_new
            open_ref[...] = open_new
            step = step + 1
            stopped = step >= max_steps
            # goal readout: one dynamic row slice + one-hot column mask
            # (no full-map multiplies / reductions per iteration).
            goal_close = jnp.sum(close_ref[pl.ds(gy, 1), :] * colmask)
            goal_g = jnp.sum(g_ref[pl.ds(gy, 1), :] * colmask)
            # Threshold 0.1*INF matches the PyTorch in-loop check verbatim (the
            # reference's *initial* check uses 0.9*ob_cost but is trivially True
            # because the close list starts at zero).
            not_done = jnp.logical_or(goal_close < 1.0, goal_g >= 0.1 * INF)
            return step, not_done, stopped

        step_f, not_done_f, stopped_f = lax.while_loop(
            cond, body, (jnp.int32(0), jnp.bool_(True), jnp.bool_(False)))

        # ---- additional_steps tail: loop-carried values, single final store ----
        if additional_steps > 0:
            @pl.when(jnp.logical_not(stopped_f))
            def _():
                def tail(_, c):
                    return one_update(*c)
                g2, c2, o2 = lax.fori_loop(
                    0, additional_steps, tail,
                    (g_ref[...], close_ref[...], open_ref[...]), unroll=2)
                g_ref[...] = g2
                close_ref[...] = c2
                open_ref[...] = o2

        # informational status (written once per solve; negligible cost)
        lane = jax.lax.broadcasted_iota(jnp.int32, (1, 128), 1)
        status_ref[...] = jnp.where(
            lane == 0, step_f,
            jnp.where(lane == 1, not_done_f.astype(jnp.int32),
                      jnp.where(lane == 2, stopped_f.astype(jnp.int32), 0)))

    return kernel


@partial(jax.jit, static_argnums=(0,))
def planner_solve(additional_steps, ctrl, colmask, cmap, obst, start):
    hp, wp = obst.shape
    vmem = pl.BlockSpec(memory_space=pltpu.MemorySpace.VMEM)
    smem = pl.BlockSpec(memory_space=pltpu.MemorySpace.SMEM)
    nbytes = 14 * hp * wp * 4           # 9 cmap + obst + start + g/close/open
    return pl.pallas_call(
        _make_planner_kernel(additional_steps),
        out_shape=(
            jax.ShapeDtypeStruct((hp, wp), jnp.float32),   # g
            jax.ShapeDtypeStruct((hp, wp), jnp.float32),   # close
            jax.ShapeDtypeStruct((hp, wp), jnp.float32),   # open
            jax.ShapeDtypeStruct((1, 128), jnp.int32),     # status: step/not_done/stopped
        ),
        in_specs=[smem, vmem, vmem, vmem, vmem],
        out_specs=(vmem, vmem, vmem, vmem),
        compiler_params=pltpu.CompilerParams(vmem_limit_bytes=_vmem_limit(nbytes)),
    )(ctrl, colmask, cmap, obst, start)


# ----------------------------------------------------------------------------
# Planner module (host-side wrapper mirrors the PyTorch forward)
# ----------------------------------------------------------------------------
class DifferentiableStarPlannerPallas:
    def __init__(self, max_steps=500, visualize=False, preprocess=False,
                 beta=100, connectivity="eight", **kwargs):
        if connectivity != "eight":
            raise ValueError('Only "eight" connectivity now supported')
        self.eps = EPS
        self.max_steps = max_steps
        self.inf = INF
        self.ob_cost = OB_COST
        self.beta = beta
        self.preprocess = preprocess
        # preprocessNet (Conv2d 1->1, 3x3, padding=1 zero pad, bias=False) weights
        self.preprocess_w = np.array(
            [[1e-05, 1e-04, 1e-05], [1e-04, 1.0, 1e-04], [1e-05, 1e-04, 1e-05]],
            dtype=np.float32)

    def preprocess_obstacle_map(self, obstacle_map):
        if not self.preprocess:
            return obstacle_map
        H, W = obstacle_map.shape
        padded = jnp.pad(obstacle_map, 1)      # zero padding, as in Conv2d
        out = jnp.zeros_like(obstacle_map)
        for ky in range(3):
            for kx in range(3):
                out = out + self.preprocess_w[ky, kx] * padded[ky:ky + H, kx:kx + W]
        return out

    def forward(self, obstacles, coords, start_map, goal_map,
                non_obstacle_cost_map=None, additional_steps=50, return_path=True):
        obst = self.preprocess_obstacle_map(jnp.asarray(obstacles, jnp.float32)[0, 0])
        coords2 = jnp.asarray(coords, jnp.float32)[0]          # (2, H, W)
        start = jnp.asarray(start_map, jnp.float32)[0, 0]
        goal = jnp.asarray(goal_map, jnp.float32)[0, 0]
        H, W = obst.shape
        self.height, self.width = H, W

        if non_obstacle_cost_map is None:
            bias = jnp.ones((H, W), jnp.float32)
        else:
            bias = jnp.asarray(non_obstacle_cost_map, jnp.float32).reshape(H, W)

        # ---- lane-dense padding: multiple of 128 with AT LEAST one pad column --
        # Pad columns are inert (cmap=+INF, obstacle=1, start/open=0, g=INF), so
        # results on the valid region are identical to the unpadded computation
        # and the planner's roll-based shifts need no column edge fix-ups.
        Wp = ((W + 128) // 128) * 128
        pad = Wp - W
        obst_edge = jnp.pad(obst, ((0, 0), (0, pad)), mode="edge")   # for cost map
        obst_plan = jnp.pad(obst, ((0, 0), (0, pad)), constant_values=1.0)
        coords_p = jnp.pad(coords2, ((0, 0), (0, 0), (0, pad)), mode="edge")
        bias_p = jnp.pad(bias, ((0, 0), (0, pad)), mode="edge")
        start_p = jnp.pad(start, ((0, 0), (0, pad)))

        c_map = compute_cost_map(obst_edge, coords_p, bias_p, w_valid=W)

        start_coords = (coords2 * start[None, :, :]).sum(axis=(1, 2))
        goal_coords = (coords2 * goal[None, :, :]).sum(axis=(1, 2))
        self.max_steps = 4 * int(
            float(jnp.sqrt(((start_coords - goal_coords) ** 2).sum() + 1e-06)))

        # goal pixel index (reference: argmax over the flattened goal map)
        goal_np = np.asarray(goal, dtype=np.float32)
        flat_idx = int(np.argmax(goal_np))
        gy, gx = flat_idx // W, flat_idx % W
        colmask = jnp.zeros((1, Wp), jnp.float32).at[0, gx].set(1.0)
        ctrl = jnp.array([gy, self.max_steps], dtype=jnp.int32)

        # NOTE: the reference's initial `not_done` check is always True because
        # the close list starts at zero, and its growing-ROI restriction of early
        # iterations is a pure no-op outside the wavefront, so the single fused
        # full-map kernel is exactly equivalent.
        # TODO(synk): for very large maps on v7x the single-block layout should
        # tile the 9-channel cost map and row-split across the two TensorCores;
        # not needed at these sizes.
        g_map, close_map, open_map, status = planner_solve(
            int(additional_steps), ctrl, colmask, c_map, obst_plan, start_p)
        jax.block_until_ready((g_map, close_map, open_map))

        # un-pad back to the original width
        self.obstacles = obst
        self.g_map = g_map[:, :W]
        self.close_list_map = close_map[:, :W]
        self.open_list_map = open_map[:, :W]
        self.coords = coords2
        self.start_coords = start_coords
        self.goal_coords = goal_coords
        self.last_status = np.asarray(status[0, :3])   # [steps, not_done, stopped]
        if return_path:
            return self.reconstruct_path()
        return None

    __call__ = forward

    # --- path reconstruction: sequential, data-dependent -> host-side numpy ---
    # TODO(synk): inherently serial pointer-chasing; kept on host (numpy).
    @staticmethod
    def _f2ind(coords_2, i):
        return int(np.round(float(coords_2[i])))

    def _propagate_traversal(self, node_coords, close, g, coords, rng):
        H, W = g.shape
        ymin = max(0, int(np.round(node_coords[0] - 1)))
        ymax = min(int(np.round(node_coords[0] + 2)), H)
        xmin = max(0, int(np.round(node_coords[1] - 1)))
        xmax = min(int(np.round(node_coords[1] + 2)), W)
        mask = close[ymin:ymax, xmin:xmax] > 0
        mask[self._f2ind(node_coords, 0) - ymin,
             self._f2ind(node_coords, 1) - xmin] = False
        cur = g[ymin:ymax, xmin:xmax][mask].copy()
        if cur.size == 0:
            mask = np.maximum(1.0 - self.been_there[ymin:ymax, xmin:xmax], 0.0)
            mask[self._f2ind(node_coords, 0) - ymin,
                 self._f2ind(node_coords, 1) - xmin] = 0.0
            mask = mask > 0
            cur = g[ymin:ymax, xmin:xmax][mask].copy()
        if cur.size > 1:
            cur = cur - cur.min()
            # TODO(synk): torch.randperm CPU RNG stream is not reproducible in
            # JAX/numpy; a fixed numpy RandomState provides the same tie-breaking.
            cur = cur + 0.41 * rng.permutation(cur.size).astype(np.float32) / cur.size
        coords_roi = coords[:, ymin:ymax, xmin:xmax]
        coords2d_flat = coords_roi[:, mask]           # HardArgMin: (2, n) columns
        idx = int(np.argmin(cur))
        return coords2d_flat[:, idx].astype(np.float32).copy()

    def reconstruct_path(self):
        g = np.asarray(self.g_map, dtype=np.float32)
        close = np.asarray(self.close_list_map, dtype=np.float32)
        coords = np.asarray(self.coords, dtype=np.float32)
        goal_coords = np.asarray(self.goal_coords, dtype=np.float32)
        start_coords = np.asarray(self.start_coords, dtype=np.float32)
        out_path = []
        cost = g[self._f2ind(goal_coords, 0), self._f2ind(goal_coords, 1)]
        node_coords = goal_coords.copy()
        out_path.append(node_coords)
        self.been_there = np.zeros_like(g)
        self.been_there[self._f2ind(node_coords, 0), self._f2ind(node_coords, 1)] = 1.0
        rng = np.random.RandomState(0)
        done = False
        count1 = 0
        while not done:
            node_coords = self._propagate_traversal(node_coords, close, g, coords, rng)
            self.been_there[self._f2ind(node_coords, 0),
                            self._f2ind(node_coords, 1)] = 1.0
            if np.linalg.norm(node_coords - out_path[-1]) < 0.3:
                raise ValueError("loop in out_path")
            out_path.append(node_coords)
            done = np.linalg.norm(node_coords - start_coords) < 0.3
            count1 += 1
            if count1 > 250:
                break
        return out_path, cost


if __name__ == "__main__":
    H, W = 16, 16
    key = jax.random.PRNGKey(0)

    # coords: (1, 2, H, W), channel 0 = y (rows), channel 1 = x (cols), pixel units
    yy = jnp.broadcast_to(jnp.arange(H, dtype=jnp.float32)[:, None], (H, W))
    xx = jnp.broadcast_to(jnp.arange(W, dtype=jnp.float32)[None, :], (H, W))
    coords = jnp.stack([yy, xx])[None]

    # random binary obstacles; keep start, goal and a connecting corridor free
    sy, sx = 2, 2
    gy, gx = 12, 12
    obst2d = (jax.random.uniform(key, (H, W)) < 0.10).astype(jnp.float32)
    obst2d = obst2d.at[2:13, 2].set(0.0)
    obst2d = obst2d.at[12, 2:13].set(0.0)
    obst2d = obst2d.at[sy, sx].set(0.0).at[gy, gx].set(0.0)
    obstacles = obst2d[None, None]                       # (1, 1, H, W)

    start_map = jnp.zeros((1, 1, H, W), jnp.float32).at[0, 0, sy, sx].set(1.0)
    goal_map = jnp.zeros((1, 1, H, W), jnp.float32).at[0, 0, gy, gx].set(1.0)

    planner = DifferentiableStarPlannerPallas()
    out_path, cost = planner.forward(obstacles, coords, start_map, goal_map,
                                     additional_steps=50, return_path=True)
    jax.block_until_ready(planner.g_map)
    print("KERNEL_OK")
</pallas_src>

<mosaic_0001>
module attributes {stable_mosaic.version = 11 : i64} {
  func.func @kernel(%arg0: memref<16x128xf32, #tpu.memory_space<vmem>>, %arg1: memref<2x16x128xf32, #tpu.memory_space<vmem>>, %arg2: memref<16x128xf32, #tpu.memory_space<vmem>>, %arg3: memref<9x16x128xf32, #tpu.memory_space<vmem>>) attributes {dimension_semantics = [], scalar_prefetch = 0 : i64, scratch_operands = 0 : i64, tpu.core_type = #tpu.core_type<tc>} {
    %0 = tpu.iota {dimensions = array<i32: 0>} : vector<16x128xi32>
    %1 = tpu.iota {dimensions = array<i32: 1>} : vector<16x128xi32>
    %c0_i32 = arith.constant 0 : i32
    %2 = vector.broadcast %c0_i32 : i32 to vector<16x128xi32>
    %3 = arith.cmpi eq, %0, %2 : vector<16x128xi32>
    %c15_i32 = arith.constant 15 : i32
    %4 = vector.broadcast %c15_i32 : i32 to vector<16x128xi32>
    %5 = arith.cmpi eq, %0, %4 : vector<16x128xi32>
    %c0_i32_0 = arith.constant 0 : i32
    %6 = vector.broadcast %c0_i32_0 : i32 to vector<16x128xi32>
    %7 = arith.cmpi eq, %1, %6 : vector<16x128xi32>
    %c127_i32 = arith.constant 127 : i32
    %8 = vector.broadcast %c127_i32 : i32 to vector<16x128xi32>
    %9 = arith.cmpi eq, %1, %8 : vector<16x128xi32>
    %c0 = arith.constant 0 : index
    %c0_1 = arith.constant 0 : index
    %10 = vector.load %arg0[%c0, %c0_1] : memref<16x128xf32, #tpu.memory_space<vmem>>, vector<16x128xf32>
    %c0_2 = arith.constant 0 : index
    %c0_3 = arith.constant 0 : index
    %c0_4 = arith.constant 0 : index
    %11 = vector.load %arg1[%c0_2, %c0_3, %c0_4] : memref<2x16x128xf32, #tpu.memory_space<vmem>>, vector<1x16x128xf32>
    %12 = vector.shape_cast %11 : vector<1x16x128xf32> to vector<16x128xf32>
    %c1 = arith.constant 1 : index
    %c0_5 = arith.constant 0 : index
    %c0_6 = arith.constant 0 : index
    %13 = vector.load %arg1[%c1, %c0_5, %c0_6] : memref<2x16x128xf32, #tpu.memory_space<vmem>>, vector<1x16x128xf32>
    %14 = vector.shape_cast %13 : vector<1x16x128xf32> to vector<16x128xf32>
    %c0_7 = arith.constant 0 : index
    %c0_8 = arith.constant 0 : index
    %15 = vector.load %arg2[%c0_7, %c0_8] : memref<16x128xf32, #tpu.memory_space<vmem>>, vector<16x128xf32>
    %cst = arith.constant 0.000000e+00 : f32
    %cst_9 = arith.constant 1.000000e+04 : f32
    %16 = vector.broadcast %cst : f32 to vector<16x128xf32>
    %17 = arith.maximumf %16, %15 : vector<16x128xf32>
    %18 = vector.broadcast %cst_9 : f32 to vector<16x128xf32>
    %19 = arith.minimumf %18, %17 : vector<16x128xf32>
    %c1_i32 = arith.constant 1 : i32
    %20 = tpu.dynamic_rotate %14 by %c1_i32 dim 1 : vector<16x128xf32>, i32 -> vector<16x128xf32>
    %21 = arith.select %7, %14, %20 : vector<16x128xi1>, vector<16x128xf32>
    %22 = arith.subf %14, %21 : vector<16x128xf32>
    %c127_i32_10 = arith.constant 127 : i32
    %23 = tpu.dynamic_rotate %14 by %c127_i32_10 dim 1 : vector<16x128xf32>, i32 -> vector<16x128xf32>
    %24 = arith.select %9, %14, %23 : vector<16x128xi1>, vector<16x128xf32>
    %25 = arith.subf %14, %24 : vector<16x128xf32>
    %c15_i32_11 = arith.constant 15 : i32
    %26 = tpu.dynamic_rotate %12 by %c15_i32_11 dim 0 : vector<16x128xf32>, i32 -> vector<16x128xf32>
    %27 = arith.select %5, %12, %26 : vector<16x128xi1>, vector<16x128xf32>
    %28 = arith.subf %12, %27 : vector<16x128xf32>
    %c1_i32_12 = arith.constant 1 : i32
    %29 = tpu.dynamic_rotate %12 by %c1_i32_12 dim 0 : vector<16x128xf32>, i32 -> vector<16x128xf32>
    %30 = arith.select %3, %12, %29 : vector<16x128xi1>, vector<16x128xf32>
    %31 = arith.subf %12, %30 : vector<16x128xf32>
    %32 = arith.mulf %22, %22 : vector<16x128xf32>
    %33 = arith.mulf %25, %25 : vector<16x128xf32>
    %34 = arith.mulf %28, %28 : vector<16x128xf32>
    %35 = arith.mulf %31, %31 : vector<16x128xf32>
    %c1_i32_13 = arith.constant 1 : i32
    %36 = tpu.dynamic_rotate %10 by %c1_i32_13 dim 0 : vector<16x128xf32>, i32 -> vector<16x128xf32>
    %37 = arith.select %3, %10, %36 : vector<16x128xi1>, vector<16x128xf32>
    %c1_i32_14 = arith.constant 1 : i32
    %38 = tpu.dynamic_rotate %37 by %c1_i32_14 dim 1 : vector<16x128xf32>, i32 -> vector<16x128xf32>
    %39 = arith.select %7, %37, %38 : vector<16x128xi1>, vector<16x128xf32>
    %c1_i32_15 = arith.constant 1 : i32
    %40 = tpu.dynamic_rotate %10 by %c1_i32_15 dim 0 : vector<16x128xf32>, i32 -> vector<16x128xf32>
    %41 = arith.select %3, %10, %40 : vector<16x128xi1>, vector<16x128xf32>
    %c1_i32_16 = arith.constant 1 : i32
    %42 = tpu.dynamic_rotate %10 by %c1_i32_16 dim 0 : vector<16x128xf32>, i32 -> vector<16x128xf32>
    %43 = arith.select %3, %10, %42 : vector<16x128xi1>, vector<16x128xf32>
    %c127_i32_17 = arith.constant 127 : i32
    %44 = tpu.dynamic_rotate %43 by %c127_i32_17 dim 1 : vector<16x128xf32>, i32 -> vector<16x128xf32>
    %45 = arith.select %9, %43, %44 : vector<16x128xi1>, vector<16x128xf32>
    %c127_i32_18 = arith.constant 127 : i32
    %46 = tpu.dynamic_rotate %10 by %c127_i32_18 dim 1 : vector<16x128xf32>, i32 -> vector<16x128xf32>
    %47 = arith.select %9, %10, %46 : vector<16x128xi1>, vector<16x128xf32>
    %c15_i32_19 = arith.constant 15 : i32
    %48 = tpu.dynamic_rotate %10 by %c15_i32_19 dim 0 : vector<16x128xf32>, i32 -> vector<16x128xf32>
    %49 = arith.select %5, %10, %48 : vector<16x128xi1>, vector<16x128xf32>
    %c1_i32_20 = arith.constant 1 : i32
    %50 = tpu.dynamic_rotate %49 by %c1_i32_20 dim 1 : vector<16x128xf32>, i32 -> vector<16x128xf32>
    %51 = arith.select %7, %49, %50 : vector<16x128xi1>, vector<16x128xf32>
    %c15_i32_21 = arith.constant 15 : i32
    %52 = tpu.dynamic_rotate %10 by %c15_i32_21 dim 0 : vector<16x128xf32>, i32 -> vector<16x128xf32>
    %53 = arith.select %5, %10, %52 : vector<16x128xi1>, vector<16x128xf32>
    %c15_i32_22 = arith.constant 15 : i32
    %54 = tpu.dynamic_rotate %10 by %c15_i32_22 dim 0 : vector<16x128xf32>, i32 -> vector<16x128xf32>
    %55 = arith.select %5, %10, %54 : vector<16x128xi1>, vector<16x128xf32>
    %c127_i32_23 = arith.constant 127 : i32
    %56 = tpu.dynamic_rotate %55 by %c127_i32_23 dim 1 : vector<16x128xf32>, i32 -> vector<16x128xf32>
    %57 = arith.select %9, %55, %56 : vector<16x128xi1>, vector<16x128xf32>
    %c16_i32 = arith.constant 16 : i32
    %58 = vector.broadcast %c16_i32 : i32 to vector<16x128xi32>
    %59 = arith.cmpi slt, %1, %58 : vector<16x128xi32>
    %60 = arith.addf %32, %34 : vector<16x128xf32>
    %61 = arith.maximumf %39, %10 : vector<16x128xf32>
    %cst_24 = arith.constant 9.99999996E-13 : f32
    %62 = vector.broadcast %cst_24 : f32 to vector<16x128xf32>
    %63 = arith.addf %60, %62 : vector<16x128xf32>
    %64 = math.sqrt %63 : vector<16x128xf32>
    %cst_25 = arith.constant 1.000000e+04 : f32
    %65 = vector.broadcast %cst_25 : f32 to vector<16x128xf32>
    %66 = arith.mulf %65, %61 : vector<16x128xf32>
    %67 = arith.addf %64, %66 : vector<16x128xf32>
    %68 = arith.addf %67, %19 : vector<16x128xf32>
    %cst_26 = arith.constant 1.000000e+07 : f32
    %69 = vector.broadcast %cst_26 : f32 to vector<16x128xf32>
    %70 = arith.select %59, %68, %69 : vector<16x128xi1>, vector<16x128xf32>
    %c0_27 = arith.constant 0 : index
    %c0_28 = arith.constant 0 : index
    %c0_29 = arith.constant 0 : index
    %71 = vector.load %arg3[%c0_27, %c0_28, %c0_29] : memref<9x16x128xf32, #tpu.memory_space<vmem>>, vector<1x16x128xf32>
    %72 = vector.shape_cast %71 : vector<1x16x128xf32> to vector<16x128xf32>
    %73 = vector.shape_cast %70 : vector<16x128xf32> to vector<1x16x128xf32>
    tpu.vector_store %arg3[%c0_27, %c0_28, %c0_29], %73 {strides = array<i32>} : memref<9x16x128xf32, #tpu.memory_space<vmem>>, vector<1x16x128xf32>,
    %74 = arith.maximumf %41, %10 : vector<16x128xf32>
    %cst_30 = arith.constant 9.99999996E-13 : f32
    %75 = vector.broadcast %cst_30 : f32 to vector<16x128xf32>
    %76 = arith.addf %32, %75 : vector<16x128xf32>
    %77 = math.sqrt %76 : vector<16x128xf32>
    %cst_31 = arith.constant 1.000000e+04 : f32
    %78 = vector.broadcast %cst_31 : f32 to vector<16x128xf32>
    %79 = arith.mulf %78, %74 : vector<16x128xf32>
    %80 = arith.addf %77, %79 : vector<16x128xf32>
    %81 = arith.addf %80, %19 : vector<16x128xf32>
    %cst_32 = arith.constant 1.000000e+07 : f32
    %82 = vector.broadcast %cst_32 : f32 to vector<16x128xf32>
    %83 = arith.select %59, %81, %82 : vector<16x128xi1>, vector<16x128xf32>
    %c1_33 = arith.constant 1 : index
    %c0_34 = arith.constant 0 : index
    %c0_35 = arith.constant 0 : index
    %84 = vector.load %arg3[%c1_33, %c0_34, %c0_35] : memref<9x16x128xf32, #tpu.memory_space<vmem>>, vector<1x16x128xf32>
    %85 = vector.shape_cast %84 : vector<1x16x128xf32> to vector<16x128xf32>
    %86 = vector.shape_cast %83 : vector<16x128xf32> to vector<1x16x128xf32>
    tpu.vector_store %arg3[%c1_33, %c0_34, %c0_35], %86 {strides = array<i32>} : memref<9x16x128xf32, #tpu.memory_space<vmem>>, vector<1x16x128xf32>,
    %87 = arith.addf %32, %35 : vector<16x128xf32>
    %88 = arith.maximumf %51, %10 : vector<16x128xf32>
    %cst_36 = arith.constant 9.99999996E-13 : f32
    %89 = vector.broadcast %cst_36 : f32 to vector<16x128xf32>
    %90 = arith.addf %87, %89 : vector<16x128xf32>
    %91 = math.sqrt %90 : vector<16x128xf32>
    %cst_37 = arith.constant 1.000000e+04 : f32
    %92 = vector.broadcast %cst_37 : f32 to vector<16x128xf32>
    %93 = arith.mulf %92, %88 : vector<16x128xf32>
    %94 = arith.addf %91, %93 : vector<16x128xf32>
    %95 = arith.addf %94, %19 : vector<16x128xf32>
    %cst_38 = arith.constant 1.000000e+07 : f32
    %96 = vector.broadcast %cst_38 : f32 to vector<16x128xf32>
    %97 = arith.select %59, %95, %96 : vector<16x128xi1>, vector<16x128xf32>
    %c2 = arith.constant 2 : index
    %c0_39 = arith.constant 0 : index
    %c0_40 = arith.constant 0 : index
    %98 = vector.load %arg3[%c2, %c0_39, %c0_40] : memref<9x16x128xf32, #tpu.memory_space<vmem>>, vector<1x16x128xf32>
    %99 = vector.shape_cast %98 : vector<1x16x128xf32> to vector<16x128xf32>
    %100 = vector.shape_cast %97 : vector<16x128xf32> to vector<1x16x128xf32>
    tpu.vector_store %arg3[%c2, %c0_39, %c0_40], %100 {strides = array<i32>} : memref<9x16x128xf32, #tpu.memory_space<vmem>>, vector<1x16x128xf32>,
    %101 = arith.maximumf %41, %10 : vector<16x128xf32>
    %cst_41 = arith.constant 9.99999996E-13 : f32
    %102 = vector.broadcast %cst_41 : f32 to vector<16x128xf32>
    %103 = arith.addf %34, %102 : vector<16x128xf32>
    %104 = math.sqrt %103 : vector<16x128xf32>
    %cst_42 = arith.constant 1.000000e+04 : f32
    %105 = vector.broadcast %cst_42 : f32 to vector<16x128xf32>
    %106 = arith.mulf %105, %101 : vector<16x128xf32>
    %107 = arith.addf %104, %106 : vector<16x128xf32>
    %108 = arith.addf %107, %19 : vector<16x128xf32>
    %cst_43 = arith.constant 1.000000e+07 : f32
    %109 = vector.broadcast %cst_43 : f32 to vector<16x128xf32>
    %110 = arith.select %59, %108, %109 : vector<16x128xi1>, vector<16x128xf32>
    %c3 = arith.constant 3 : index
    %c0_44 = arith.constant 0 : index
    %c0_45 = arith.constant 0 : index
    %111 = vector.load %arg3[%c3, %c0_44, %c0_45] : memref<9x16x128xf32, #tpu.memory_space<vmem>>, vector<1x16x128xf32>
    %112 = vector.shape_cast %111 : vector<1x16x128xf32> to vector<16x128xf32>
    %113 = vector.shape_cast %110 : vector<16x128xf32> to vector<1x16x128xf32>
    tpu.vector_store %arg3[%c3, %c0_44, %c0_45], %113 {strides = array<i32>} : memref<9x16x128xf32, #tpu.memory_space<vmem>>, vector<1x16x128xf32>,
    %cst_46 = arith.constant 1.000000e+04 : f32
    %114 = vector.broadcast %cst_46 : f32 to vector<16x128xf32>
    %115 = arith.mulf %114, %10 : vector<16x128xf32>
    %116 = arith.addf %115, %19 : vector<16x128xf32>
    %cst_47 = arith.constant 1.000000e+07 : f32
    %117 = vector.broadcast %cst_47 : f32 to vector<16x128xf32>
    %118 = arith.select %59, %116, %117 : vector<16x128xi1>, vector<16x128xf32>
    %c4 = arith.constant 4 : index
    %c0_48 = arith.constant 0 : index
    %c0_49 = arith.constant 0 : index
    %119 = vector.load %arg3[%c4, %c0_48, %c0_49] : memref<9x16x128xf32, #tpu.memory_space<vmem>>, vector<1x16x128xf32>
    %120 = vector.shape_cast %119 : vector<1x16x128xf32> to vector<16x128xf32>
    %121 = vector.shape_cast %118 : vector<16x128xf32> to vector<1x16x128xf32>
    tpu.vector_store %arg3[%c4, %c0_48, %c0_49], %121 {strides = array<i32>} : memref<9x16x128xf32, #tpu.memory_space<vmem>>, vector<1x16x128xf32>,
    %122 = arith.maximumf %53, %10 : vector<16x128xf32>
    %cst_50 = arith.constant 9.99999996E-13 : f32
    %123 = vector.broadcast %cst_50 : f32 to vector<16x128xf32>
    %124 = arith.addf %35, %123 : vector<16x128xf32>
    %125 = math.sqrt %124 : vector<16x128xf32>
    %cst_51 = arith.constant 1.000000e+04 : f32
    %126 = vector.broadcast %cst_51 : f32 to vector<16x128xf32>
    %127 = arith.mulf %126, %122 : vector<16x128xf32>
    %128 = arith.addf %125, %127 : vector<16x128xf32>
    %129 = arith.addf %128, %19 : vector<16x128xf32>
    %cst_52 = arith.constant 1.000000e+07 : f32
    %130 = vector.broadcast %cst_52 : f32 to vector<16x128xf32>
    %131 = arith.select %59, %129, %130 : vector<16x128xi1>, vector<16x128xf32>
    %c5 = arith.constant 5 : index
    %c0_53 = arith.constant 0 : index
    %c0_54 = arith.constant 0 : index
    %132 = vector.load %arg3[%c5, %c0_53, %c0_54] : memref<9x16x128xf32, #tpu.memory_space<vmem>>, vector<1x16x128xf32>
    %133 = vector.shape_cast %132 : vector<1x16x128xf32> to vector<16x128xf32>
    %134 = vector.shape_cast %131 : vector<16x128xf32> to vector<1x16x128xf32>
    tpu.vector_store %arg3[%c5, %c0_53, %c0_54], %134 {strides = array<i32>} : memref<9x16x128xf32, #tpu.memory_space<vmem>>, vector<1x16x128xf32>,
    %135 = arith.addf %33, %34 : vector<16x128xf32>
    %136 = arith.maximumf %45, %10 : vector<16x128xf32>
    %cst_55 = arith.constant 9.99999996E-13 : f32
    %137 = vector.broadcast %cst_55 : f32 to vector<16x128xf32>
    %138 = arith.addf %135, %137 : vector<16x128xf32>
    %139 = math.sqrt %138 : vector<16x128xf32>
    %cst_56 = arith.constant 1.000000e+04 : f32
    %140 = vector.broadcast %cst_56 : f32 to vector<16x128xf32>
    %141 = arith.mulf %140, %136 : vector<16x128xf32>
    %142 = arith.addf %139, %141 : vector<16x128xf32>
    %143 = arith.addf %142, %19 : vector<16x128xf32>
    %cst_57 = arith.constant 1.000000e+07 : f32
    %144 = vector.broadcast %cst_57 : f32 to vector<16x128xf32>
    %145 = arith.select %59, %143, %144 : vector<16x128xi1>, vector<16x128xf32>
    %c6 = arith.constant 6 : index
    %c0_58 = arith.constant 0 : index
    %c0_59 = arith.constant 0 : index
    %146 = vector.load %arg3[%c6, %c0_58, %c0_59] : memref<9x16x128xf32, #tpu.memory_space<vmem>>, vector<1x16x128xf32>
    %147 = vector.shape_cast %146 : vector<1x16x128xf32> to vector<16x128xf32>
    %148 = vector.shape_cast %145 : vector<16x128xf32> to vector<1x16x128xf32>
    tpu.vector_store %arg3[%c6, %c0_58, %c0_59], %148 {strides = array<i32>} : memref<9x16x128xf32, #tpu.memory_space<vmem>>, vector<1x16x128xf32>,
    %149 = arith.maximumf %47, %10 : vector<16x128xf32>
    %cst_60 = arith.constant 9.99999996E-13 : f32
    %150 = vector.broadcast %cst_60 : f32 to vector<16x128xf32>
    %151 = arith.addf %33, %150 : vector<16x128xf32>
    %152 = math.sqrt %151 : vector<16x128xf32>
    %cst_61 = arith.constant 1.000000e+04 : f32
    %153 = vector.broadcast %cst_61 : f32 to vector<16x128xf32>
    %154 = arith.mulf %153, %149 : vector<16x128xf32>
    %155 = arith.addf %152, %154 : vector<16x128xf32>
    %156 = arith.addf %155, %19 : vector<16x128xf32>
    %cst_62 = arith.constant 1.000000e+07 : f32
    %157 = vector.broadcast %cst_62 : f32 to vector<16x128xf32>
    %158 = arith.select %59, %156, %157 : vector<16x128xi1>, vector<16x128xf32>
    %c7 = arith.constant 7 : index
    %c0_63 = arith.constant 0 : index
    %c0_64 = arith.constant 0 : index
    %159 = vector.load %arg3[%c7, %c0_63, %c0_64] : memref<9x16x128xf32, #tpu.memory_space<vmem>>, vector<1x16x128xf32>
    %160 = vector.shape_cast %159 : vector<1x16x128xf32> to vector<16x128xf32>
    %161 = vector.shape_cast %158 : vector<16x128xf32> to vector<1x16x128xf32>
    tpu.vector_store %arg3[%c7, %c0_63, %c0_64], %161 {strides = array<i32>} : memref<9x16x128xf32, #tpu.memory_space<vmem>>, vector<1x16x128xf32>,
    %162 = arith.addf %33, %35 : vector<16x128xf32>
    %163 = arith.maximumf %57, %10 : vector<16x128xf32>
    %cst_65 = arith.constant 9.99999996E-13 : f32
    %164 = vector.broadcast %cst_65 : f32 to vector<16x128xf32>
    %165 = arith.addf %162, %164 : vector<16x128xf32>
    %166 = math.sqrt %165 : vector<16x128xf32>
    %cst_66 = arith.constant 1.000000e+04 : f32
    %167 = vector.broadcast %cst_66 : f32 to vector<16x128xf32>
    %168 = arith.mulf %167, %163 : vector<16x128xf32>
    %169 = arith.addf %166, %168 : vector<16x128xf32>
    %170 = arith.addf %169, %19 : vector<16x128xf32>
    %cst_67 = arith.constant 1.000000e+07 : f32
    %171 = vector.broadcast %cst_67 : f32 to vector<16x128xf32>
    %172 = arith.select %59, %170, %171 : vector<16x128xi1>, vector<16x128xf32>
    %c8 = arith.constant 8 : index
    %c0_68 = arith.constant 0 : index
    %c0_69 = arith.constant 0 : index
    %173 = vector.load %arg3[%c8, %c0_68, %c0_69] : memref<9x16x128xf32, #tpu.memory_space<vmem>>, vector<1x16x128xf32>
    %174 = vector.shape_cast %173 : vector<1x16x128xf32> to vector<16x128xf32>
    %175 = vector.shape_cast %172 : vector<16x128xf32> to vector<1x16x128xf32>
    tpu.vector_store %arg3[%c8, %c0_68, %c0_69], %175 {strides = array<i32>} : memref<9x16x128xf32, #tpu.memory_space<vmem>>, vector<1x16x128xf32>,
    return
  }
}

</mosaic_0001>

<llo_original>
// kernel: compute_cost_map.1
$region0: #{compute_cost_map.1}
  #allocation0 [shape = 'u32[]', space=smem, size = 0x4, offset = 0x4, fixed_abs, tag = 'smem constant byte address 0x4 - core index']
  #allocation1 [shape = 'u32[72,128]{1,0:T(1,128)}', space=vmem, size = 0x9000, scoped, tag = 'internal scratch']
  %s0 = inlined_call_operand.hbm [shape: f32[16,128], index: 0, kind: input, shape index: {}]
  %s1 = inlined_call_operand.hbm [shape: f32[2,16,128], index: 1, kind: input, shape index: {}]
  %s2 = inlined_call_operand.hbm [shape: f32[16,128], index: 2, kind: input, shape index: {}]
  %s3 = inlined_call_operand.hbm [shape: f32[9,16,128], index: 3, kind: output, shape index: {}]
  %s4 = sld [smem:[#allocation0]]
  $region34: #{compute_cost_map.1} parent=0
    _
  %s6 = ssub.s32 1, %s4
  %s7 = scalar_select 0, %s6, %s4
  $region1: #{compute_cost_map.1} parent=0
    #allocation2 [shape = 'u8[8192]{0}', space=vmem, size = 0x2000, scoped, tag = 'input window, operand 0, single buffered']
    #allocation3 [shape = 's32[1]{0}', space=sflag, size = 0x4, scoped, tag = 'scoped memory for compute_cost_map.1']
    #allocation4 [shape = 's32[1]{0}', space=sflag, size = 0x4, scoped, tag = 'scoped memory for compute_cost_map.1']
    #allocation5 [shape = 'u8[16384]{0}', space=vmem, size = 0x4000, scoped, tag = 'input window, operand 1, single buffered']
    #allocation6 [shape = 's32[1]{0}', space=sflag, size = 0x4, scoped, tag = 'scoped memory for compute_cost_map.1']
    #allocation7 [shape = 'u8[8192]{0}', space=vmem, size = 0x2000, scoped, tag = 'input window, operand 2, single buffered']
    #allocation8 [shape = 'u8[73728]{0}', space=vmem, size = 0x12000, scoped, tag = 'output window, operand 0, single buffered']
    %8 = vsyncpa [#allocation3], 0
    %9 = vsyncpa [#allocation6], 0
    %10 = vsyncpa [#allocation4], 0
    // Predicated region
    $region2: #{compute_cost_map.1} parent=1 // pred_check
      _
    $region3: #{compute_cost_map.1} parent=1 // pred_check_branch
      %12 = sbr.rel (0) target = $region5
    $region4: #{compute_cost_map.1} parent=1 // pred_region
      %14 = vsyncadd [#allocation3], 0
      %s15 = sshll.u32 %s0, 4
      %s16 = int_to_ptr.hbm [resolvable:$true] %s15
      %s17 = sshll.u32 [#allocation2], 4
      %s18 = int_to_ptr.vmem [resolvable:$true] %s17
      %23 = dma.hbm_to_vmem [thread:$0]  %s16, 256, %s18, [#allocation3], 128, 128, 8
    $region5: #{compute_cost_map.1} parent=1 // pred_fallthru
      _
    // Predicated region
    $region6: #{compute_cost_map.1} parent=1 // pred_check
      _
    $region7: #{compute_cost_map.1} parent=1 // pred_check_branch
      %25 = sbr.rel (0) target = $region9
    $region8: #{compute_cost_map.1} parent=1 // pred_region
      %27 = vsyncadd [#allocation6], 0
      %s28 = sshll.u32 %s1, 4
      %s29 = int_to_ptr.hbm [resolvable:$true] %s28
      %s30 = sshll.u32 [#allocation5], 4
      %s31 = int_to_ptr.vmem [resolvable:$true] %s30
      %36 = dma.hbm_to_vmem [thread:$0]  %s29, 512, %s31, [#allocation6], 128, 128, 8
    $region9: #{compute_cost_map.1} parent=1 // pred_fallthru
      _
    // Predicated region
    $region10: #{compute_cost_map.1} parent=1 // pred_check
      _
    $region11: #{compute_cost_map.1} parent=1 // pred_check_branch
      %38 = sbr.rel (0) target = $region13
    $region12: #{compute_cost_map.1} parent=1 // pred_region
      %40 = vsyncadd [#allocation6], 0
      %s41 = sshll.u32 %s2, 4
      %s42 = int_to_ptr.hbm [resolvable:$true] %s41
      %s43 = sshll.u32 [#allocation7], 4
      %s44 = int_to_ptr.vmem [resolvable:$true] %s43
      %49 = dma.hbm_to_vmem [thread:$0]  %s42, 256, %s44, [#allocation6], 128, 128, 8
    $region13: #{compute_cost_map.1} parent=1 // pred_fallthru
      _
    // Predicated region
    $region14: #{compute_cost_map.1} parent=1 // pred_check
      _
    $region15: #{compute_cost_map.1} parent=1 // pred_check_branch
      %51 = sbr.rel (0) target = $region17
    $region16: #{compute_cost_map.1} parent=1 // pred_region
      %53 = dma.done [#allocation3], 256
    $region17: #{compute_cost_map.1} parent=1 // pred_fallthru
      _
    // Predicated region
    $region18: #{compute_cost_map.1} parent=1 // pred_check
      _
    $region19: #{compute_cost_map.1} parent=1 // pred_check_branch
      %55 = sbr.rel (0) target = $region21
    $region20: #{compute_cost_map.1} parent=1 // pred_region
      %57 = dma.done [#allocation6], 512
    $region21: #{compute_cost_map.1} parent=1 // pred_fallthru
      _
    // Predicated region
    $region22: #{compute_cost_map.1} parent=1 // pred_check
      _
    $region23: #{compute_cost_map.1} parent=1 // pred_check_branch
      %59 = sbr.rel (0) target = $region25
    $region24: #{compute_cost_map.1} parent=1 // pred_region
      %61 = dma.done [#allocation6], 256
    $region25: #{compute_cost_map.1} parent=1 // pred_fallthru
      _
    %v62 = vlaneseq
    %v63 = vshrl.u32 %v62, 7
    %v64 = vadd.s32 %v63, 8
    %v65 = vlaneseq
    %v66 = vand.u32 %v65, 127
    %vm67 = vcmp.eq.s32.totalorder %v63, 0
    %vm68 = vcmp.eq.s32.totalorder %v64, 0
    %vm69 = vcmp.eq.s32.totalorder %v63, 15
    %vm70 = vcmp.eq.s32.totalorder %v64, 15
    %vm71 = vcmp.eq.s32.totalorder %v66, 0
    %vm72 = vcmp.eq.s32.totalorder %v66, 127
    %v73 = vld [vmem:[#allocation2] sm:$0xff]
    %v74 = vld [vmem:[#allocation2 + $0x8] sm:$0xff]
    %v75 = vld [vmem:[#allocation5] sm:$0xff]
    %v76 = vld [vmem:[#allocation5 + $0x8] sm:$0xff]
    %s77 = scalar_lea.vmem [#allocation5], 16
    %v78 = vld [vmem:[%s77] sm:$0xff]
    %v79 = vld [vmem:[%s77 + $0x8] sm:$0xff]
    %v80 = vld [vmem:[#allocation7] sm:$0xff]
    %v81 = vld [vmem:[#allocation7 + $0x8] sm:$0xff]
    %v82 = vmax.f32 %v80, 0.0
    %v83 = vmax.f32 %v81, 0.0
    %v84 = vmin.f32 %v82, 10000.0
    %v85 = vmin.f32 %v83, 10000.0
    %86 = vrot.lane.b32.xlu0 %v78, 1
    %v87 = vpop.permute.xlu0 %86
    %88 = vrot.lane.b32.xlu0 %v79, 1
    %v89 = vpop.permute.xlu0 %88
    %v90 = vsel %vm71, %v78, %v87
    %v91 = vsel %vm71, %v79, %v89
    %v92 = vsub.f32 %v78, %v90
    %v93 = vsub.f32 %v79, %v91
    %94 = vrot.lane.b32.xlu0 %v78, 127
    %v95 = vpop.permute.xlu0 %94
    %96 = vrot.lane.b32.xlu0 %v79, 127
    %v97 = vpop.permute.xlu0 %96
    %v98 = vsel %vm72, %v78, %v95
    %v99 = vsel %vm72, %v79, %v97
    %v100 = vsub.f32 %v78, %v98
    %v101 = vsub.f32 %v79, %v99
    %v102 = vrot.slane %v75, 1
    %v103 = vrot.slane %v76, 1
    %vm104 = vcmp.lt.s32.totalorder %v63, 7
    %v105 = vsel %vm104, %v102, %v103
    %v106 = vsel %vm104, %v103, %v102
    %v107 = vsel %vm69, %v75, %v105
    %v108 = vsel %vm70, %v76, %v106
    %v109 = vsub.f32 %v75, %v107
    %v110 = vsub.f32 %v76, %v108
    %v111 = vrot.slane %v75, 7
    %v112 = vrot.slane %v76, 7
    %vm113 = vcmp.lt.s32.totalorder %v63, 1
    %v114 = vsel %vm113, %v111, %v112
    %v115 = vsel %vm113, %v112, %v111
    %v116 = vsel %vm67, %v75, %v115
    %v117 = vsel %vm68, %v76, %v114
    %v118 = vsub.f32 %v75, %v116
    %v119 = vsub.f32 %v76, %v117
    %v120 = vmul.f32 %v92, %v92
    %v121 = vmul.f32 %v93, %v93
    %v122 = vmul.f32 %v100, %v100
    %v123 = vmul.f32 %v101, %v101
    %v124 = vmul.f32 %v109, %v109
    %v125 = vmul.f32 %v110, %v110
    %v126 = vmul.f32 %v118, %v118
    %v127 = vmul.f32 %v119, %v119
    %v128 = vrot.slane %v73, 7
    %v129 = vrot.slane %v74, 7
    %v130 = vsel %vm113, %v128, %v129
    %v131 = vsel %vm113, %v129, %v128
    %v132 = vsel %vm67, %v73, %v131
    %v133 = vsel %vm68, %v74, %v130
    %134 = vrot.lane.b32.xlu0 %v132, 1
    %v135 = vpop.permute.xlu0 %134
    %136 = vrot.lane.b32.xlu0 %v133, 1
    %v137 = vpop.permute.xlu0 %136
    %v138 = vsel %vm71, %v132, %v135
    %v139 = vsel %vm71, %v133, %v137
    %140 = vrot.lane.b32.xlu0 %v132, 127
    %v141 = vpop.permute.xlu0 %140
    %142 = vrot.lane.b32.xlu0 %v133, 127
    %v143 = vpop.permute.xlu0 %142
    %v144 = vsel %vm72, %v132, %v141
    %v145 = vsel %vm72, %v133, %v143
    %146 = vrot.lane.b32.xlu0 %v73, 127
    %v147 = vpop.permute.xlu0 %146
    %148 = vrot.lane.b32.xlu0 %v74, 127
    %v149 = vpop.permute.xlu0 %148
    %v150 = vsel %vm72, %v73, %v147
    %v151 = vsel %vm72, %v74, %v149
    %v152 = vrot.slane %v73, 1
    %v153 = vrot.slane %v74, 1
    %v154 = vsel %vm104, %v152, %v153
    %v155 = vsel %vm104, %v153, %v152
    %v156 = vsel %vm69, %v73, %v154
    %v157 = vsel %vm70, %v74, %v155
    %158 = vrot.lane.b32.xlu0 %v156, 1
    %v159 = vpop.permute.xlu0 %158
    %160 = vrot.lane.b32.xlu0 %v157, 1
    %v161 = vpop.permute.xlu0 %160
    %v162 = vsel %vm71, %v156, %v159
    %v163 = vsel %vm71, %v157, %v161
    %164 = vrot.lane.b32.xlu0 %v156, 127
    %v165 = vpop.permute.xlu0 %164
    %166 = vrot.lane.b32.xlu0 %v157, 127
    %v167 = vpop.permute.xlu0 %166
    %v168 = vsel %vm72, %v156, %v165
    %v169 = vsel %vm72, %v157, %v167
    %vm170 = vcmp.lt.s32.totalorder %v66, 16
    %v171 = vadd.f32 %v120, %v124
    %v172 = vadd.f32 %v121, %v125
    %v173 = vmax.f32 %v138, %v73
    %v174 = vmax.f32 %v139, %v74
    %v175 = vadd.f32 %v171, 1e-12
    %v176 = vadd.f32 %v172, 1e-12
    %v177 = vrsqrt.pop %v175
    %v178 = vmul.f32 %v177, %v175
    %v179 = vmul.f32 %v178, %v177
    %v180 = vmul.f32 0.5, %v179
    %v181 = vsub.f32 1.5, %v180
    %v182 = vmul.f32 %v177, %v181
    %v183 = vmul.f32 %v175, %v182
    %vm184 = vcmp.eq.f32.partialorder %v175, inf
    %v185 = vsel %vm184, %v175, %v183
    %vm186 = vcmp.eq.f32.partialorder %v175, 0.0
    %v187 = vand.u32 %v175, 2147483648
    %v188 = vsel %vm186, %v187, %v185
    %v189 = vrsqrt.pop %v176
    %v190 = vmul.f32 %v189, %v176
    %v191 = vmul.f32 %v190, %v189
    %v192 = vmul.f32 0.5, %v191
    %v193 = vsub.f32 1.5, %v192
    %v194 = vmul.f32 %v189, %v193
    %v195 = vmul.f32 %v176, %v194
    %vm196 = vcmp.eq.f32.partialorder %v176, inf
    %v197 = vsel %vm196, %v176, %v195
    %vm198 = vcmp.eq.f32.partialorder %v176, 0.0
    %v199 = vand.u32 %v176, 2147483648
    %v200 = vsel %vm198, %v199, %v197
    %v201 = vmul.f32 %v173, 10000.0
    %v202 = vmul.f32 %v174, 10000.0
    %v203 = vadd.f32 %v188, %v201
    %v204 = vadd.f32 %v200, %v202
    %v205 = vadd.f32 %v203, %v84
    %v206 = vadd.f32 %v204, %v85
    %v207 = vsel %vm170, %v205, 10000000.0
    %v208 = vsel %vm170, %v206, 10000000.0
    %209 = vst [vmem:[#allocation8] sm:$0xff] %v207
    %210 = vst [vmem:[#allocation8 + $0x8] sm:$0xff] %v208
    %v211 = vmax.f32 %v132, %v73
    %v212 = vmax.f32 %v133, %v74
    %v213 = vadd.f32 %v120, 1e-12
    %v214 = vadd.f32 %v121, 1e-12
    %v215 = vrsqrt.pop %v213
    %v216 = vmul.f32 %v215, %v213
    %v217 = vmul.f32 %v216, %v215
    %v218 = vmul.f32 0.5, %v217
    %v219 = vsub.f32 1.5, %v218
    %v220 = vmul.f32 %v215, %v219
    %v221 = vmul.f32 %v213, %v220
    %vm222 = vcmp.eq.f32.partialorder %v213, inf
    %v223 = vsel %vm222, %v213, %v221
    %vm224 = vcmp.eq.f32.partialorder %v213, 0.0
    %v225 = vand.u32 %v213, 2147483648
    %v226 = vsel %vm224, %v225, %v223
    %v227 = vrsqrt.pop %v214
    %v228 = vmul.f32 %v227, %v214
    %v229 = vmul.f32 %v228, %v227
    %v230 = vmul.f32 0.5, %v229
    %v231 = vsub.f32 1.5, %v230
    %v232 = vmul.f32 %v227, %v231
    %v233 = vmul.f32 %v214, %v232
    %vm234 = vcmp.eq.f32.partialorder %v214, inf
    %v235 = vsel %vm234, %v214, %v233
    %vm236 = vcmp.eq.f32.partialorder %v214, 0.0
    %v237 = vand.u32 %v214, 2147483648
    %v238 = vsel %vm236, %v237, %v235
    %v239 = vmul.f32 %v211, 10000.0
    %v240 = vmul.f32 %v212, 10000.0
    %v241 = vadd.f32 %v226, %v239
    %v242 = vadd.f32 %v238, %v240
    %v243 = vadd.f32 %v241, %v84
    %v244 = vadd.f32 %v242, %v85
    %v245 = vsel %vm170, %v243, 10000000.0
    %v246 = vsel %vm170, %v244, 10000000.0
    %s247 = scalar_lea.vmem [#allocation8], 16
    %248 = vst [vmem:[%s247] sm:$0xff] %v245
    %249 = vst [vmem:[%s247 + $0x8] sm:$0xff] %v246
    %v250 = vadd.f32 %v120, %v126
    %v251 = vadd.f32 %v121, %v127
    %v252 = vmax.f32 %v162, %v73
    %v253 = vmax.f32 %v163, %v74
    %v254 = vadd.f32 %v250, 1e-12
    %v255 = vadd.f32 %v251, 1e-12
    %v256 = vrsqrt.pop %v254
    %v257 = vmul.f32 %v256, %v254
    %v258 = vmul.f32 %v257, %v256
    %v259 = vmul.f32 0.5, %v258
    %v260 = vsub.f32 1.5, %v259
    %v261 = vmul.f32 %v256, %v260
    %v262 = vmul.f32 %v254, %v261
    %vm263 = vcmp.eq.f32.partialorder %v254, inf
    %v264 = vsel %vm263, %v254, %v262
    %vm265 = vcmp.eq.f32.partialorder %v254, 0.0
    %v266 = vand.u32 %v254, 2147483648
    %v267 = vsel %vm265, %v266, %v264
    %v268 = vrsqrt.pop %v255
    %v269 = vmul.f32 %v268, %v255
    %v270 = vmul.f32 %v269, %v268
    %v271 = vmul.f32 0.5, %v270
    %v272 = vsub.f32 1.5, %v271
    %v273 = vmul.f32 %v268, %v272
    %v274 = vmul.f32 %v255, %v273
    %vm275 = vcmp.eq.f32.partialorder %v255, inf
    %v276 = vsel %vm275, %v255, %v274
    %vm277 = vcmp.eq.f32.partialorder %v255, 0.0
    %v278 = vand.u32 %v255, 2147483648
    %v279 = vsel %vm277, %v278, %v276
    %v280 = vmul.f32 %v252, 10000.0
    %v281 = vmul.f32 %v253, 10000.0
    %v282 = vadd.f32 %v267, %v280
    %v283 = vadd.f32 %v279, %v281
    %v284 = vadd.f32 %v282, %v84
    %v285 = vadd.f32 %v283, %v85
    %v286 = vsel %vm170, %v284, 10000000.0
    %v287 = vsel %vm170, %v285, 10000000.0
    %s288 = scalar_lea.vmem [#allocation8], 32
    %289 = vst [vmem:[%s288] sm:$0xff] %v286
    %290 = vst [vmem:[%s288 + $0x8] sm:$0xff] %v287
    %v291 = vadd.f32 %v124, 1e-12
    %v292 = vadd.f32 %v125, 1e-12
    %v293 = vrsqrt.pop %v291
    %v294 = vmul.f32 %v293, %v291
    %v295 = vmul.f32 %v294, %v293
    %v296 = vmul.f32 0.5, %v295
    %v297 = vsub.f32 1.5, %v296
    %v298 = vmul.f32 %v293, %v297
    %v299 = vmul.f32 %v291, %v298
    %vm300 = vcmp.eq.f32.partialorder %v291, inf
    %v301 = vsel %vm300, %v291, %v299
    %vm302 = vcmp.eq.f32.partialorder %v291, 0.0
    %v303 = vand.u32 %v291, 2147483648
    %v304 = vsel %vm302, %v303, %v301
    %v305 = vrsqrt.pop %v292
    %v306 = vmul.f32 %v305, %v292
    %v307 = vmul.f32 %v306, %v305
    %v308 = vmul.f32 0.5, %v307
    %v309 = vsub.f32 1.5, %v308
    %v310 = vmul.f32 %v305, %v309
    %v311 = vmul.f32 %v292, %v310
    %vm312 = vcmp.eq.f32.partialorder %v292, inf
    %v313 = vsel %vm312, %v292, %v311
    %vm314 = vcmp.eq.f32.partialorder %v292, 0.0
    %v315 = vand.u32 %v292, 2147483648
    %v316 = vsel %vm314, %v315, %v313
    %v317 = vadd.f32 %v304, %v239
    %v318 = vadd.f32 %v316, %v240
    %v319 = vadd.f32 %v317, %v84
    %v320 = vadd.f32 %v318, %v85
    %v321 = vsel %vm170, %v319, 10000000.0
    %v322 = vsel %vm170, %v320, 10000000.0
    %s323 = scalar_lea.vmem [#allocation8], 48
    %324 = vst [vmem:[%s323] sm:$0xff] %v321
    %325 = vst [vmem:[%s323 + $0x8] sm:$0xff] %v322
    %v326 = vmul.f32 %v73, 10000.0
    %v327 = vmul.f32 %v74, 10000.0
    %v328 = vadd.f32 %v326, %v84
    %v329 = vadd.f32 %v327, %v85
    %v330 = vsel %vm170, %v328, 10000000.0
    %v331 = vsel %vm170, %v329, 10000000.0
    %s332 = scalar_lea.vmem [#allocation8], 64
    %333 = vst [vmem:[%s332] sm:$0xff] %v330
    %334 = vst [vmem:[%s332 + $0x8] sm:$0xff] %v331
    %v335 = vmax.f32 %v156, %v73
    %v336 = vmax.f32 %v157, %v74
    %v337 = vadd.f32 %v126, 1e-12
    %v338 = vadd.f32 %v127, 1e-12
    %v339 = vrsqrt.pop %v337
    %v340 = vmul.f32 %v339, %v337
    %v341 = vmul.f32 %v340, %v339
    %v342 = vmul.f32 0.5, %v341
    %v343 = vsub.f32 1.5, %v342
    %v344 = vmul.f32 %v339, %v343
    %v345 = vmul.f32 %v337, %v344
    %vm346 = vcmp.eq.f32.partialorder %v337, inf
    %v347 = vsel %vm346, %v337, %v345
    %vm348 = vcmp.eq.f32.partialorder %v337, 0.0
    %v349 = vand.u32 %v337, 2147483648
    %v350 = vsel %vm348, %v349, %v347
    %v351 = vrsqrt.pop %v338
    %v352 = vmul.f32 %v351, %v338
    %v353 = vmul.f32 %v352, %v351
    %v354 = vmul.f32 0.5, %v353
    %v355 = vsub.f32 1.5, %v354
    %v356 = vmul.f32 %v351, %v355
    %v357 = vmul.f32 %v338, %v356
    %vm358 = vcmp.eq.f32.partialorder %v338, inf
    %v359 = vsel %vm358, %v338, %v357
    %vm360 = vcmp.eq.f32.partialorder %v338, 0.0
    %v361 = vand.u32 %v338, 2147483648
    %v362 = vsel %vm360, %v361, %v359
    %v363 = vmul.f32 %v335, 10000.0
    %v364 = vmul.f32 %v336, 10000.0
    %v365 = vadd.f32 %v350, %v363
    %v366 = vadd.f32 %v362, %v364
    %v367 = vadd.f32 %v365, %v84
    %v368 = vadd.f32 %v366, %v85
    %v369 = vsel %vm170, %v367, 10000000.0
    %v370 = vsel %vm170, %v368, 10000000.0
    %s371 = scalar_lea.vmem [#allocation8], 80
    %372 = vst [vmem:[%s371] sm:$0xff] %v369
    %373 = vst [vmem:[%s371 + $0x8] sm:$0xff] %v370
    %v374 = vadd.f32 %v122, %v124
    %v375 = vadd.f32 %v123, %v125
    %v376 = vmax.f32 %v144, %v73
    %v377 = vmax.f32 %v145, %v74
    %v378 = vadd.f32 %v374, 1e-12
    %v379 = vadd.f32 %v375, 1e-12
    %v380 = vrsqrt.pop %v378
    %v381 = vmul.f32 %v380, %v378
    %v382 = vmul.f32 %v381, %v380
    %v383 = vmul.f32 0.5, %v382
    %v384 = vsub.f32 1.5, %v383
    %v385 = vmul.f32 %v380, %v384
    %v386 = vmul.f32 %v378, %v385
    %vm387 = vcmp.eq.f32.partialorder %v378, inf
    %v388 = vsel %vm387, %v378, %v386
    %vm389 = vcmp.eq.f32.partialorder %v378, 0.0
    %v390 = vand.u32 %v378, 2147483648
    %v391 = vsel %vm389, %v390, %v388
    %v392 = vrsqrt.pop %v379
    %v393 = vmul.f32 %v392, %v379
    %v394 = vmul.f32 %v393, %v392
    %v395 = vmul.f32 0.5, %v394
    %v396 = vsub.f32 1.5, %v395
    %v397 = vmul.f32 %v392, %v396
    %v398 = vmul.f32 %v379, %v397
    %vm399 = vcmp.eq.f32.partialorder %v379, inf
    %v400 = vsel %vm399, %v379, %v398
    %vm401 = vcmp.eq.f32.partialorder %v379, 0.0
    %v402 = vand.u32 %v379, 2147483648
    %v403 = vsel %vm401, %v402, %v400
    %v404 = vmul.f32 %v376, 10000.0
    %v405 = vmul.f32 %v377, 10000.0
    %v406 = vadd.f32 %v391, %v404
    %v407 = vadd.f32 %v403, %v405
    %v408 = vadd.f32 %v406, %v84
    %v409 = vadd.f32 %v407, %v85
    %v410 = vsel %vm170, %v408, 10000000.0
    %v411 = vsel %vm170, %v409, 10000000.0
    %s412 = scalar_lea.vmem [#allocation8], 96
    %413 = vst [vmem:[%s412] sm:$0xff] %v410
    %414 = vst [vmem:[%s412 + $0x8] sm:$0xff] %v411
    %v415 = vmax.f32 %v150, %v73
    %v416 = vmax.f32 %v151, %v74
    %v417 = vadd.f32 %v122, 1e-12
    %v418 = vadd.f32 %v123, 1e-12
    %v419 = vrsqrt.pop %v417
    %v420 = vmul.f32 %v419, %v417
    %v421 = vmul.f32 %v420, %v419
    %v422 = vmul.f32 0.5, %v421
    %v423 = vsub.f32 1.5, %v422
    %v424 = vmul.f32 %v419, %v423
    %v425 = vmul.f32 %v417, %v424
    %vm426 = vcmp.eq.f32.partialorder %v417, inf
    %v427 = vsel %vm426, %v417, %v425
    %vm428 = vcmp.eq.f32.partialorder %v417, 0.0
    %v429 = vand.u32 %v417, 2147483648
    %v430 = vsel %vm428, %v429, %v427
    %v431 = vrsqrt.pop %v418
    %v432 = vmul.f32 %v431, %v418
    %v433 = vmul.f32 %v432, %v431
    %v434 = vmul.f32 0.5, %v433
    %v435 = vsub.f32 1.5, %v434
    %v436 = vmul.f32 %v431, %v435
    %v437 = vmul.f32 %v418, %v436
    %vm438 = vcmp.eq.f32.partialorder %v418, inf
    %v439 = vsel %vm438, %v418, %v437
    %vm440 = vcmp.eq.f32.partialorder %v418, 0.0
    %v441 = vand.u32 %v418, 2147483648
    %v442 = vsel %vm440, %v441, %v439
    %v443 = vmul.f32 %v415, 10000.0
    %v444 = vmul.f32 %v416, 10000.0
    %v445 = vadd.f32 %v430, %v443
    %v446 = vadd.f32 %v442, %v444
    %v447 = vadd.f32 %v445, %v84
    %v448 = vadd.f32 %v446, %v85
    %v449 = vsel %vm170, %v447, 10000000.0
    %v450 = vsel %vm170, %v448, 10000000.0
    %s451 = scalar_lea.vmem [#allocation8], 112
    %452 = vst [vmem:[%s451] sm:$0xff] %v449
    %453 = vst [vmem:[%s451 + $0x8] sm:$0xff] %v450
    %v454 = vadd.f32 %v122, %v126
    %v455 = vadd.f32 %v123, %v127
    %v456 = vmax.f32 %v168, %v73
    %v457 = vmax.f32 %v169, %v74
    %v458 = vadd.f32 %v454, 1e-12
    %v459 = vadd.f32 %v455, 1e-12
    %v460 = vrsqrt.pop %v458
    %v461 = vmul.f32 %v460, %v458
    %v462 = vmul.f32 %v461, %v460
    %v463 = vmul.f32 0.5, %v462
    %v464 = vsub.f32 1.5, %v463
    %v465 = vmul.f32 %v460, %v464
    %v466 = vmul.f32 %v458, %v465
    %vm467 = vcmp.eq.f32.partialorder %v458, inf
    %v468 = vsel %vm467, %v458, %v466
    %vm469 = vcmp.eq.f32.partialorder %v458, 0.0
    %v470 = vand.u32 %v458, 2147483648
    %v471 = vsel %vm469, %v470, %v468
    %v472 = vrsqrt.pop %v459
    %v473 = vmul.f32 %v472, %v459
    %v474 = vmul.f32 %v473, %v472
    %v475 = vmul.f32 0.5, %v474
    %v476 = vsub.f32 1.5, %v475
    %v477 = vmul.f32 %v472, %v476
    %v478 = vmul.f32 %v459, %v477
    %vm479 = vcmp.eq.f32.partialorder %v459, inf
    %v480 = vsel %vm479, %v459, %v478
    %vm481 = vcmp.eq.f32.partialorder %v459, 0.0
    %v482 = vand.u32 %v459, 2147483648
    %v483 = vsel %vm481, %v482, %v480
    %v484 = vmul.f32 %v456, 10000.0
    %v485 = vmul.f32 %v457, 10000.0
    %v486 = vadd.f32 %v471, %v484
    %v487 = vadd.f32 %v483, %v485
    %v488 = vadd.f32 %v486, %v84
    %v489 = vadd.f32 %v487, %v85
    %v490 = vsel %vm170, %v488, 10000000.0
    %v491 = vsel %vm170, %v489, 10000000.0
    %s492 = scalar_lea.vmem [#allocation8], 128
    %493 = vst [vmem:[%s492] sm:$0xff] %v490
    %494 = vst [vmem:[%s492 + $0x8] sm:$0xff] %v491
    // Predicated region
    $region26: #{compute_cost_map.1} parent=1 // pred_check
      _
    $region27: #{compute_cost_map.1} parent=1 // pred_check_branch
      %496 = sbr.rel (0) target = $region29
    $region28: #{compute_cost_map.1} parent=1 // pred_region
      %498 = vsyncadd [#allocation4], 0
      %s499 = sshll.u32 [#allocation8], 4
      %s500 = int_to_ptr.vmem [resolvable:$true] %s499
      %s501 = sshll.u32 %s3, 4
      %s502 = int_to_ptr.hbm [resolvable:$true] %s501
      %507 = dma.vmem_to_hbm [thread:$0]  %s500, 2304, %s502, [#allocation4], 128, 128, 8
    $region29: #{compute_cost_map.1} parent=1 // pred_fallthru
      _
    // Predicated region
    $region30: #{compute_cost_map.1} parent=1 // pred_check
      _
    $region31: #{compute_cost_map.1} parent=1 // pred_check_branch
      %509 = sbr.rel (0) target = $region33
    $region32: #{compute_cost_map.1} parent=1 // pred_region
      %511 = dma.done [#allocation4], 2304
    $region33: #{compute_cost_map.1} parent=1 // pred_fallthru
      _
    %512 = vsyncpa [#allocation3], 1
    %513 = vsyncpa [#allocation6], 1
    %514 = vsyncpa [#allocation4], 1

</llo_original>
